<compile_context>
chip_gen: v7x
topology: tpu7x:2x2x1
jax: 0.10.0
libtpu: 0.0.40
codegen_flags: <defaults>
</compile_context>

<pallas_src>
import functools

import jax
import jax.numpy as jnp
from jax import lax
from jax.experimental import pallas as pl
from jax.experimental.pallas import tpu as pltpu

H1 = 256   # first hidden dim (fixed by the module)
H2 = 50    # second hidden dim (fixed by the module)

# dot_general dimension numbers contracting the LAST dim of both operands ("NT").
_CONTRACT_LAST = (((1,), (1,)), ((), ()))


def _round_up(x, m):
    return (x + m - 1) // m * m


def _cdiv(a, b):
    return -(-a // b)


def _leaky(x):
    # LeakyReLU(0.2): max(x, 0.2*x) is exact for slopes in (0, 1).
    return jnp.maximum(x, 0.2 * x)


def _rank_kernel(g_ref, d_ref,
                 w1g_ref, b1g_ref, w2g_ref, b2g_ref,
                 w1d_ref, b1d_ref, w2d_ref, b2d_ref,
                 out_ref, *, ep_dtype):
    """One batch tile: natural (TB, F) activations, (in, out) weights, (1, TB) scores."""
    cdt = w1g_ref.dtype  # MXU input dtype (f32 or bf16)

    def mlp(x_ref, w1_ref, b1_ref, w2_ref, b2_ref):
        # Layer 1: (TB, F) @ (F, H1) -> (TB, H1), f32 accumulation on the MXU.
        x = x_ref[...].astype(cdt)          # in-kernel cast; activations stay f32 in HBM
        h = jnp.dot(x, w1_ref[...], preferred_element_type=jnp.float32)
        # Bias + LeakyReLU epilogue in ep_dtype (bf16 on v6e/v7x halves the big
        # (TB, 256) intermediate; keep f32 on v5e via epilogue_dtype=float32).
        h = _leaky(h.astype(ep_dtype) + b1_ref[...])
        # Layer 2: (TB, H1) @ (H1, H2) -> (TB, H2); small epilogue stays f32.
        o = jnp.dot(h.astype(cdt), w2_ref[...], preferred_element_type=jnp.float32)
        return _leaky(o + b2_ref[...])

    # Sequence the two paths (gene fully, then disease) so only one (TB, H1)
    # intermediate is live at a time.
    og = mlp(g_ref, w1g_ref, b1g_ref, w2g_ref, b2g_ref)     # (TB, H2) f32
    od = mlp(d_ref, w1d_ref, b1d_ref, w2d_ref, b2d_ref)     # (TB, H2) f32

    # Per-row dot product <og[b], od[b]>, written lane-dense: contracting H2 against a
    # ones row makes the MXU emit the (1, TB) score row directly (batch on lanes), with
    # no transpose and no 1-lane masked stores.
    prod = og * od                                           # (TB, H2) f32
    ones_row = jnp.ones((1, H2), jnp.float32)
    out_ref[...] = lax.dot_general(ones_row, prod, _CONTRACT_LAST,
                                   preferred_element_type=jnp.float32)


def _choose_batch_tiling(batch, block_b):
    """Pick (tile, num_blocks).

    tile is a multiple of 128 (or the full padded extent for a single block), the
    padded-batch waste stays below ~half a tile, and large batches get >= 2 (even)
    grid steps so "parallel" dimension semantics can shard across both v7x TCs.
    """
    min_blocks = 2 if batch >= 1024 else 1
    num_blocks = max(min_blocks, _cdiv(batch, block_b))
    if num_blocks == 1:
        return max(8, _round_up(batch, 8)), 1
    if num_blocks % 2:
        num_blocks += 1
    tile = _round_up(_cdiv(batch, num_blocks), 128)
    num_blocks = _cdiv(batch, tile)          # drop blocks that would be pure padding
    return tile, num_blocks


def _prepare_params(params, compute_dtype, ep_dtype):
    """Torch-layout (out, in) weights -> (in, out) MXU-friendly layout; biases as rows.

    Tiny (~100 KB) one-off transform; nothing activation-sized is materialized.
    """
    def w(name):
        return jnp.asarray(params[name]).T.astype(compute_dtype)          # (in, out)

    def b(name, dtype):
        return jnp.asarray(params[name]).reshape(1, -1).astype(dtype)     # (1, out)

    return (w("w1g"), b("b1g", ep_dtype), w("w2g"), b("b2g", jnp.float32),
            w("w1d"), b("b1d", ep_dtype), w("w2d"), b("b2d", jnp.float32))


@functools.partial(jax.jit,
                   static_argnames=("compute_dtype", "epilogue_dtype", "block_b"))
def rank_model_forward(gene, disease, params, *,
                       compute_dtype=jnp.bfloat16,
                       epilogue_dtype=None,
                       block_b=2048):
    """gene, disease: (B, num_feature) float32.  Returns s1 of shape (B,) (pre-sigmoid)."""
    assert gene.shape == disease.shape
    assert block_b % 128 == 0 and block_b >= 128
    B, F = gene.shape
    ep_dtype = compute_dtype if epilogue_dtype is None else epilogue_dtype

    tb, num_blocks = _choose_batch_tiling(B, block_b)
    b_work = num_blocks * tb

    # Single-block tiles are full-extent, so the array itself must match the tile
    # (pad at most 7 rows).  Multi-block partial tail tiles are handled by Pallas:
    # out-of-bounds rows only affect padded output columns that are sliced off below.
    if num_blocks == 1 and tb != B:
        pad = ((0, tb - B), (0, 0))
        gene = jnp.pad(gene, pad)
        disease = jnp.pad(disease, pad)

    w1g, b1g, w2g, b2g, w1d, b1d, w2d, b2d = _prepare_params(
        params, compute_dtype, ep_dtype)

    x_spec = pl.BlockSpec((tb, F), lambda i: (i, 0))

    def resident(shape):
        # Constant index_map -> weights/biases stay VMEM-resident across grid steps.
        return pl.BlockSpec(shape, lambda i: (0, 0))

    w_itemsize = jnp.dtype(compute_dtype).itemsize
    flops = 4 * b_work * (F * H1 + H1 * H2) + 2 * b_work * H2
    bytes_accessed = (2 * b_work * F * 4                       # f32 activations, read once
                      + 2 * (F * H1 + H1 * H2) * w_itemsize    # weights
                      + 2 * (H1 * jnp.dtype(ep_dtype).itemsize + H2 * 4)  # biases
                      + b_work * 4)                            # scores out

    kernel = functools.partial(_rank_kernel, ep_dtype=ep_dtype)

    out = pl.pallas_call(
        kernel,
        out_shape=jax.ShapeDtypeStruct((1, b_work), jnp.float32),
        grid=(num_blocks,),
        in_specs=[
            x_spec, x_spec,
            resident((F, H1)), resident((1, H1)),
            resident((H1, H2)), resident((1, H2)),
            resident((F, H1)), resident((1, H1)),
            resident((H1, H2)), resident((1, H2)),
        ],
        out_specs=pl.BlockSpec((1, tb), lambda i: (0, i)),
        compiler_params=pltpu.CompilerParams(
            dimension_semantics=("parallel",),
            vmem_limit_bytes=32 * 1024 * 1024,
        ),
        cost_estimate=pl.CostEstimate(
            flops=int(flops), transcendentals=0, bytes_accessed=int(bytes_accessed)),
    )(gene, disease, w1g, b1g, w2g, b2g, w1d, b1d, w2d, b2d)

    return out[0, :B]


def init_params(key, num_feature):
    """Deterministic synthetic parameters in PyTorch nn.Linear layout (out, in)."""
    ks = jax.random.split(key, 8)

    def lin(kw, kb, fan_in, fan_out):
        bound = 1.0 / jnp.sqrt(jnp.float32(fan_in))
        w = jax.random.uniform(kw, (fan_out, fan_in), jnp.float32, -bound, bound)
        b = jax.random.uniform(kb, (fan_out,), jnp.float32, -bound, bound)
        return w, b

    w1g, b1g = lin(ks[0], ks[1], num_feature, H1)
    w2g, b2g = lin(ks[2], ks[3], H1, H2)
    w1d, b1d = lin(ks[4], ks[5], num_feature, H1)
    w2d, b2d = lin(ks[6], ks[7], H1, H2)
    return dict(w1g=w1g, b1g=b1g, w2g=w2g, b2g=b2g,
                w1d=w1d, b1d=b1d, w2d=w2d, b2d=b2d)


def _reference(gene, disease, p):
    leaky = lambda x: jnp.maximum(x, 0.2 * x)
    mm = lambda a, b: jnp.dot(a, b, precision=jax.lax.Precision.HIGHEST)
    g = leaky(mm(leaky(mm(gene, p["w1g"].T) + p["b1g"]), p["w2g"].T) + p["b2g"])
    d = leaky(mm(leaky(mm(disease, p["w1d"].T) + p["b1d"]), p["w2d"].T) + p["b2d"])
    return jnp.sum(g * d, axis=-1)


if __name__ == "__main__":
    key = jax.random.PRNGKey(0)
    k_p, k_g, k_d, k_g2, k_d2 = jax.random.split(key, 5)

    NUM_FEATURE = 100   # matches predict()'s view(-1, 2, 100) convention
    params = init_params(k_p, NUM_FEATURE)

    # Small shape: single grid block.
    B = 8
    gene = jax.random.normal(k_g, (B, NUM_FEATURE), jnp.float32)
    disease = jax.random.normal(k_d, (B, NUM_FEATURE), jnp.float32)
    ref = _reference(gene, disease, params)

    # Full f32 path.
    s_f32 = jax.block_until_ready(
        rank_model_forward(gene, disease, params, compute_dtype=jnp.float32))
    assert s_f32.shape == (B,)
    assert jnp.allclose(s_f32, ref, atol=1e-2, rtol=1e-2), (s_f32, ref)

    # bf16 fast path (f32 accumulation, bf16 layer-1 epilogue) -- production config.
    s_bf16 = jax.block_until_ready(rank_model_forward(gene, disease, params))
    assert s_bf16.shape == (B,)
    assert jnp.allclose(s_bf16, ref, atol=2.5e-1, rtol=1e-1), (s_bf16, ref)

    # Larger batch: exercises the multi-block grid + partial tail tile path.
    B2 = 1040
    gene2 = jax.random.normal(k_g2, (B2, NUM_FEATURE), jnp.float32)
    disease2 = jax.random.normal(k_d2, (B2, NUM_FEATURE), jnp.float32)
    ref2 = _reference(gene2, disease2, params)
    s2 = jax.block_until_ready(rank_model_forward(gene2, disease2, params))
    assert s2.shape == (B2,)
    assert jnp.allclose(s2, ref2, atol=2.5e-1, rtol=1e-1), \
        float(jnp.max(jnp.abs(s2 - ref2)))

    print("KERNEL_OK")
</pallas_src>

<mosaic_0001>
module attributes {stable_mosaic.version = 11 : i64} {
  func.func @_rank_kernel(%arg0: i32, %arg1: memref<8x100xf32, #tpu.memory_space<vmem>>, %arg2: memref<8x100xf32, #tpu.memory_space<vmem>>, %arg3: memref<100x256xf32, #tpu.memory_space<vmem>>, %arg4: memref<1x256xf32, #tpu.memory_space<vmem>>, %arg5: memref<256x50xf32, #tpu.memory_space<vmem>>, %arg6: memref<1x50xf32, #tpu.memory_space<vmem>>, %arg7: memref<100x256xf32, #tpu.memory_space<vmem>>, %arg8: memref<1x256xf32, #tpu.memory_space<vmem>>, %arg9: memref<256x50xf32, #tpu.memory_space<vmem>>, %arg10: memref<1x50xf32, #tpu.memory_space<vmem>>, %arg11: memref<1x8xf32, #tpu.memory_space<vmem>>) attributes {dimension_semantics = [#tpu.dimension_semantics<parallel>], iteration_bounds = array<i64: 1>, scalar_prefetch = 0 : i64, scratch_operands = 0 : i64, tpu.core_type = #tpu.core_type<tc>, window_params = [{transform_indices = @transform_0, window_bounds = array<i64: 8, 100>}, {transform_indices = @transform_1, window_bounds = array<i64: 8, 100>}, {pipeline_mode = #tpu.pipeline_mode<synchronous>, transform_indices = @transform_2, window_bounds = array<i64: 100, 256>}, {pipeline_mode = #tpu.pipeline_mode<synchronous>, transform_indices = @transform_3, window_bounds = array<i64: 1, 256>}, {pipeline_mode = #tpu.pipeline_mode<synchronous>, transform_indices = @transform_4, window_bounds = array<i64: 256, 50>}, {pipeline_mode = #tpu.pipeline_mode<synchronous>, transform_indices = @transform_5, window_bounds = array<i64: 1, 50>}, {pipeline_mode = #tpu.pipeline_mode<synchronous>, transform_indices = @transform_6, window_bounds = array<i64: 100, 256>}, {pipeline_mode = #tpu.pipeline_mode<synchronous>, transform_indices = @transform_7, window_bounds = array<i64: 1, 256>}, {pipeline_mode = #tpu.pipeline_mode<synchronous>, transform_indices = @transform_8, window_bounds = array<i64: 256, 50>}, {pipeline_mode = #tpu.pipeline_mode<synchronous>, transform_indices = @transform_9, window_bounds = array<i64: 1, 50>}, {transform_indices = @transform_10, window_bounds = array<i64: 1, 8>}]} {
    %c0 = arith.constant 0 : index
    %c0_0 = arith.constant 0 : index
    %0 = vector.load %arg1[%c0, %c0_0] : memref<8x100xf32, #tpu.memory_space<vmem>>, vector<8x100xf32>
    %c0_1 = arith.constant 0 : index
    %c0_2 = arith.constant 0 : index
    %1 = vector.load %arg3[%c0_1, %c0_2] : memref<100x256xf32, #tpu.memory_space<vmem>>, vector<100x256xf32>
    %cst = arith.constant dense<0.000000e+00> : vector<8x256xf32>
    %2 = tpu.matmul %0, %1, %cst {dimension_numbers = #tpu.dot_dimension_numbers<[1], [0], [0], [1], [0, 0, 1, 1], [], []>} : vector<8x100xf32>, vector<100x256xf32>, vector<8x256xf32> -> vector<8x256xf32>
    %c0_3 = arith.constant 0 : index
    %c0_4 = arith.constant 0 : index
    %3 = vector.load %arg4[%c0_3, %c0_4] : memref<1x256xf32, #tpu.memory_space<vmem>>, vector<1x256xf32>
    %4 = vector.broadcast %3 : vector<1x256xf32> to vector<8x256xf32>
    %5 = arith.addf %2, %4 : vector<8x256xf32>
    %cst_5 = arith.constant 2.000000e-01 : f32
    %6 = vector.broadcast %cst_5 : f32 to vector<8x256xf32>
    %7 = arith.mulf %6, %5 : vector<8x256xf32>
    %8 = arith.maximumf %5, %7 : vector<8x256xf32>
    %c0_6 = arith.constant 0 : index
    %c0_7 = arith.constant 0 : index
    %9 = vector.load %arg5[%c0_6, %c0_7] : memref<256x50xf32, #tpu.memory_space<vmem>>, vector<256x50xf32>
    %cst_8 = arith.constant dense<0.000000e+00> : vector<8x50xf32>
    %10 = tpu.matmul %8, %9, %cst_8 {dimension_numbers = #tpu.dot_dimension_numbers<[1], [0], [0], [1], [0, 0, 1, 1], [], []>} : vector<8x256xf32>, vector<256x50xf32>, vector<8x50xf32> -> vector<8x50xf32>
    %c0_9 = arith.constant 0 : index
    %c0_10 = arith.constant 0 : index
    %11 = vector.load %arg6[%c0_9, %c0_10] : memref<1x50xf32, #tpu.memory_space<vmem>>, vector<1x50xf32>
    %12 = vector.broadcast %11 : vector<1x50xf32> to vector<8x50xf32>
    %13 = arith.addf %10, %12 : vector<8x50xf32>
    %cst_11 = arith.constant 2.000000e-01 : f32
    %14 = vector.broadcast %cst_11 : f32 to vector<8x50xf32>
    %15 = arith.mulf %14, %13 : vector<8x50xf32>
    %16 = arith.maximumf %13, %15 : vector<8x50xf32>
    %c0_12 = arith.constant 0 : index
    %c0_13 = arith.constant 0 : index
    %17 = vector.load %arg2[%c0_12, %c0_13] : memref<8x100xf32, #tpu.memory_space<vmem>>, vector<8x100xf32>
    %c0_14 = arith.constant 0 : index
    %c0_15 = arith.constant 0 : index
    %18 = vector.load %arg7[%c0_14, %c0_15] : memref<100x256xf32, #tpu.memory_space<vmem>>, vector<100x256xf32>
    %cst_16 = arith.constant dense<0.000000e+00> : vector<8x256xf32>
    %19 = tpu.matmul %17, %18, %cst_16 {dimension_numbers = #tpu.dot_dimension_numbers<[1], [0], [0], [1], [0, 0, 1, 1], [], []>} : vector<8x100xf32>, vector<100x256xf32>, vector<8x256xf32> -> vector<8x256xf32>
    %c0_17 = arith.constant 0 : index
    %c0_18 = arith.constant 0 : index
    %20 = vector.load %arg8[%c0_17, %c0_18] : memref<1x256xf32, #tpu.memory_space<vmem>>, vector<1x256xf32>
    %21 = vector.broadcast %20 : vector<1x256xf32> to vector<8x256xf32>
    %22 = arith.addf %19, %21 : vector<8x256xf32>
    %cst_19 = arith.constant 2.000000e-01 : f32
    %23 = vector.broadcast %cst_19 : f32 to vector<8x256xf32>
    %24 = arith.mulf %23, %22 : vector<8x256xf32>
    %25 = arith.maximumf %22, %24 : vector<8x256xf32>
    %c0_20 = arith.constant 0 : index
    %c0_21 = arith.constant 0 : index
    %26 = vector.load %arg9[%c0_20, %c0_21] : memref<256x50xf32, #tpu.memory_space<vmem>>, vector<256x50xf32>
    %cst_22 = arith.constant dense<0.000000e+00> : vector<8x50xf32>
    %27 = tpu.matmul %25, %26, %cst_22 {dimension_numbers = #tpu.dot_dimension_numbers<[1], [0], [0], [1], [0, 0, 1, 1], [], []>} : vector<8x256xf32>, vector<256x50xf32>, vector<8x50xf32> -> vector<8x50xf32>
    %c0_23 = arith.constant 0 : index
    %c0_24 = arith.constant 0 : index
    %28 = vector.load %arg10[%c0_23, %c0_24] : memref<1x50xf32, #tpu.memory_space<vmem>>, vector<1x50xf32>
    %29 = vector.broadcast %28 : vector<1x50xf32> to vector<8x50xf32>
    %30 = arith.addf %27, %29 : vector<8x50xf32>
    %cst_25 = arith.constant 2.000000e-01 : f32
    %31 = vector.broadcast %cst_25 : f32 to vector<8x50xf32>
    %32 = arith.mulf %31, %30 : vector<8x50xf32>
    %33 = arith.maximumf %30, %32 : vector<8x50xf32>
    %34 = arith.mulf %16, %33 : vector<8x50xf32>
    %cst_26 = arith.constant 1.000000e+00 : f32
    %35 = vector.broadcast %cst_26 : f32 to vector<1x50xf32>
    %cst_27 = arith.constant dense<0.000000e+00> : vector<1x8xf32>
    %36 = tpu.matmul %35, %34, %cst_27 {dimension_numbers = #tpu.dot_dimension_numbers<[1], [1], [0], [0], [0, 0, 1, 0], [], []>} : vector<1x50xf32>, vector<8x50xf32>, vector<1x8xf32> -> vector<1x8xf32>
    %c0_28 = arith.constant 0 : index
    %c0_29 = arith.constant 0 : index
    %37 = vector.load %arg11[%c0_28, %c0_29] : memref<1x8xf32, #tpu.memory_space<vmem>>, vector<1x8xf32>
    tpu.vector_store %arg11[%c0_28, %c0_29], %36 {strides = array<i32>} : memref<1x8xf32, #tpu.memory_space<vmem>>, vector<1x8xf32>,
    return
  }
  func.func @transform_0(%arg0: i32) -> (i32, i32) {
    %c0_i32 = arith.constant 0 : i32
    %c0_i32_0 = arith.constant 0 : i32
    return %arg0, %c0_i32 : i32, i32
  }
  func.func @transform_1(%arg0: i32) -> (i32, i32) {
    %c0_i32 = arith.constant 0 : i32
    %c0_i32_0 = arith.constant 0 : i32
    return %arg0, %c0_i32 : i32, i32
  }
  func.func @transform_2(%arg0: i32) -> (i32, i32) {
    %c0_i32 = arith.constant 0 : i32
    %c0_i32_0 = arith.constant 0 : i32
    %c0_i32_1 = arith.constant 0 : i32
    return %c0_i32, %c0_i32_0 : i32, i32
  }
  func.func @transform_3(%arg0: i32) -> (i32, i32) {
    %c0_i32 = arith.constant 0 : i32
    %c0_i32_0 = arith.constant 0 : i32
    %c0_i32_1 = arith.constant 0 : i32
    return %c0_i32, %c0_i32_0 : i32, i32
  }
  func.func @transform_4(%arg0: i32) -> (i32, i32) {
    %c0_i32 = arith.constant 0 : i32
    %c0_i32_0 = arith.constant 0 : i32
    %c0_i32_1 = arith.constant 0 : i32
    return %c0_i32, %c0_i32_0 : i32, i32
  }
  func.func @transform_5(%arg0: i32) -> (i32, i32) {
    %c0_i32 = arith.constant 0 : i32
    %c0_i32_0 = arith.constant 0 : i32
    %c0_i32_1 = arith.constant 0 : i32
    return %c0_i32, %c0_i32_0 : i32, i32
  }
  func.func @transform_6(%arg0: i32) -> (i32, i32) {
    %c0_i32 = arith.constant 0 : i32
    %c0_i32_0 = arith.constant 0 : i32
    %c0_i32_1 = arith.constant 0 : i32
    return %c0_i32, %c0_i32_0 : i32, i32
  }
  func.func @transform_7(%arg0: i32) -> (i32, i32) {
    %c0_i32 = arith.constant 0 : i32
    %c0_i32_0 = arith.constant 0 : i32
    %c0_i32_1 = arith.constant 0 : i32
    return %c0_i32, %c0_i32_0 : i32, i32
  }
  func.func @transform_8(%arg0: i32) -> (i32, i32) {
    %c0_i32 = arith.constant 0 : i32
    %c0_i32_0 = arith.constant 0 : i32
    %c0_i32_1 = arith.constant 0 : i32
    return %c0_i32, %c0_i32_0 : i32, i32
  }
  func.func @transform_9(%arg0: i32) -> (i32, i32) {
    %c0_i32 = arith.constant 0 : i32
    %c0_i32_0 = arith.constant 0 : i32
    %c0_i32_1 = arith.constant 0 : i32
    return %c0_i32, %c0_i32_0 : i32, i32
  }
  func.func @transform_10(%arg0: i32) -> (i32, i32) {
    %c0_i32 = arith.constant 0 : i32
    %c0_i32_0 = arith.constant 0 : i32
    return %c0_i32, %arg0 : i32, i32
  }
}

</mosaic_0001>

<llo_original>
// kernel: rank_model_forward.1
$region0: #{rank_model_forward.1}
  #allocation0 [shape = 'u32[]', space=smem, size = 0x4, offset = 0x4, fixed_abs, tag = 'smem constant byte address 0x4 - core index']
  #allocation1 [shape = 'u32[144,128]{1,0:T(1,128)}', space=vmem, size = 0x12000, scoped, tag = 'internal scratch']
  %s0 = inlined_call_operand.vmem [shape: f32[8,100], index: 0, kind: input, shape index: {}]
  %s1 = inlined_call_operand.vmem [shape: f32[8,100], index: 1, kind: input, shape index: {}]
  %s2 = inlined_call_operand.vmem [shape: f32[100,256], index: 2, kind: input, shape index: {}]
  %s3 = inlined_call_operand.vmem [shape: f32[1,256], index: 3, kind: input, shape index: {}]
  %s4 = inlined_call_operand.vmem [shape: f32[256,50], index: 4, kind: input, shape index: {}]
  %s5 = inlined_call_operand.vmem [shape: f32[1,50], index: 5, kind: input, shape index: {}]
  %s6 = inlined_call_operand.vmem [shape: f32[100,256], index: 6, kind: input, shape index: {}]
  %s7 = inlined_call_operand.vmem [shape: f32[1,256], index: 7, kind: input, shape index: {}]
  %s8 = inlined_call_operand.vmem [shape: f32[256,50], index: 8, kind: input, shape index: {}]
  %s9 = inlined_call_operand.vmem [shape: f32[1,50], index: 9, kind: input, shape index: {}]
  %s10 = inlined_call_operand.hbm [shape: f32[1,8], index: 10, kind: output, shape index: {}]
  %s11 = sld [smem:[#allocation0]]
  $region50: #{rank_model_forward.1} parent=0
    _
  %s13 = ssub.s32 1, %s11
  %s14 = scalar_select 0, %s13, %s11
  $region1: #{rank_model_forward.1} parent=0
    #allocation2 [shape = 'u8[512]{0}', space=vmem, size = 0x400, scoped, tag = 'output window, operand 0, single buffered']
    #allocation3 [shape = 's32[1]{0}', space=sflag, size = 0x4, scoped, tag = 'scoped memory for rank_model_forward.1']
    %15 = vsyncpa [#allocation3], 0
    // Predicated region
    $region2: #{rank_model_forward.1} parent=1 // pred_check
      _
    $region3: #{rank_model_forward.1} parent=1 // pred_check_branch
      %17 = sbr.rel (0) target = $region5
    $region4: #{rank_model_forward.1} parent=1 // pred_region
      _
    $region5: #{rank_model_forward.1} parent=1 // pred_fallthru
      _
    // Predicated region
    $region6: #{rank_model_forward.1} parent=1 // pred_check
      _
    $region7: #{rank_model_forward.1} parent=1 // pred_check_branch
      %19 = sbr.rel (0) target = $region9
    $region8: #{rank_model_forward.1} parent=1 // pred_region
      _
    $region9: #{rank_model_forward.1} parent=1 // pred_fallthru
      _
    // Predicated region
    $region10: #{rank_model_forward.1} parent=1 // pred_check
      _
    $region11: #{rank_model_forward.1} parent=1 // pred_check_branch
      %21 = sbr.rel (0) target = $region13
    $region12: #{rank_model_forward.1} parent=1 // pred_region
      _
    $region13: #{rank_model_forward.1} parent=1 // pred_fallthru
      _
    // Predicated region
    $region14: #{rank_model_forward.1} parent=1 // pred_check
      _
    $region15: #{rank_model_forward.1} parent=1 // pred_check_branch
      %23 = sbr.rel (0) target = $region17
    $region16: #{rank_model_forward.1} parent=1 // pred_region
      _
    $region17: #{rank_model_forward.1} parent=1 // pred_fallthru
      _
    // Predicated region
    $region18: #{rank_model_forward.1} parent=1 // pred_check
      _
    $region19: #{rank_model_forward.1} parent=1 // pred_check_branch
      %25 = sbr.rel (0) target = $region21
    $region20: #{rank_model_forward.1} parent=1 // pred_region
      _
    $region21: #{rank_model_forward.1} parent=1 // pred_fallthru
      _
    // Predicated region
    $region22: #{rank_model_forward.1} parent=1 // pred_check
      _
    $region23: #{rank_model_forward.1} parent=1 // pred_check_branch
      %27 = sbr.rel (0) target = $region25
    $region24: #{rank_model_forward.1} parent=1 // pred_region
      _
    $region25: #{rank_model_forward.1} parent=1 // pred_fallthru
      _
    // Predicated region
    $region26: #{rank_model_forward.1} parent=1 // pred_check
      _
    $region27: #{rank_model_forward.1} parent=1 // pred_check_branch
      %29 = sbr.rel (0) target = $region29
    $region28: #{rank_model_forward.1} parent=1 // pred_region
      _
    $region29: #{rank_model_forward.1} parent=1 // pred_fallthru
      _
    // Predicated region
    $region30: #{rank_model_forward.1} parent=1 // pred_check
      _
    $region31: #{rank_model_forward.1} parent=1 // pred_check_branch
      %31 = sbr.rel (0) target = $region33
    $region32: #{rank_model_forward.1} parent=1 // pred_region
      _
    $region33: #{rank_model_forward.1} parent=1 // pred_fallthru
      _
    // Predicated region
    $region34: #{rank_model_forward.1} parent=1 // pred_check
      _
    $region35: #{rank_model_forward.1} parent=1 // pred_check_branch
      %33 = sbr.rel (0) target = $region37
    $region36: #{rank_model_forward.1} parent=1 // pred_region
      _
    $region37: #{rank_model_forward.1} parent=1 // pred_fallthru
      _
    // Predicated region
    $region38: #{rank_model_forward.1} parent=1 // pred_check
      _
    $region39: #{rank_model_forward.1} parent=1 // pred_check_branch
      %35 = sbr.rel (0) target = $region41
    $region40: #{rank_model_forward.1} parent=1 // pred_region
      _
    $region41: #{rank_model_forward.1} parent=1 // pred_fallthru
      _
    %v36 = vld [vmem:[%s0] sm:$0xff]
    %v37 = vld [vmem:[%s2] sm:$0xff]
    %v38 = vld [vmem:[%s2 + $0x8] sm:$0xff]
    %v39 = vld [vmem:[%s2 + $0x10] sm:$0xff]
    %v40 = vld [vmem:[%s2 + $0x18] sm:$0xff]
    %v41 = vld [vmem:[%s2 + $0x20] sm:$0xff]
    %v42 = vld [vmem:[%s2 + $0x28] sm:$0xff]
    %v43 = vld [vmem:[%s2 + $0x30] sm:$0xff]
    %v44 = vld [vmem:[%s2 + $0x38] sm:$0xff]
    %v45 = vld [vmem:[%s2 + $0x40] sm:$0xff]
    %v46 = vld [vmem:[%s2 + $0x48] sm:$0xff]
    %v47 = vld [vmem:[%s2 + $0x50] sm:$0xff]
    %v48 = vld [vmem:[%s2 + $0x58] sm:$0xff]
    %v49 = vld [vmem:[%s2 + $0x60] sm:$0xff]
    %v50 = vld [vmem:[%s2 + $0x68] sm:$0xff]
    %v51 = vld [vmem:[%s2 + $0x70] sm:$0xff]
    %v52 = vld [vmem:[%s2 + $0x78] sm:$0xff]
    %v53 = vld [vmem:[%s2 + $0x80] sm:$0xff]
    %v54 = vld [vmem:[%s2 + $0x88] sm:$0xff]
    %v55 = vld [vmem:[%s2 + $0x90] sm:$0xff]
    %v56 = vld [vmem:[%s2 + $0x98] sm:$0xff]
    %v57 = vld [vmem:[%s2 + $0xa0] sm:$0xff]
    %v58 = vld [vmem:[%s2 + $0xa8] sm:$0xff]
    %v59 = vld [vmem:[%s2 + $0xb0] sm:$0xff]
    %v60 = vld [vmem:[%s2 + $0xb8] sm:$0xff]
    %v61 = vld [vmem:[%s2 + $0xc0] sm:$0xf]
    %v62 = vld [vmem:[%s2 + $0xc8] sm:$0xf]
    %v63 = vld [vmem:[%s3] sm:$0x3]
    %v65 = vlaneseq
    %v66 = vshrl.u32 %v65, 7
    %v67 = vsub.s32 0, %v66
    %v68 = vrot.slane %v63, %v67
    %v69 = vlaneseq
    %v70 = vshrl.u32 %v69, 7
    %v71 = vsub.s32 1, %v70
    %v72 = vrot.slane %v63, %v71
    %vm75 = vcmask 818176
    %v77 = vsel %vm75, %v36, 0
    %vm79 = vcmask 1043456
    %v81 = vsel %vm79, %v61, 0
    %v84 = vsel %vm79, %v62, 0
    %86 = vmatprep.subr.mxu0 %v38
    %87 = vmatpush1.msra.mxu0 %v37
    %88 = vmatprep.subr.mxu0 %v40
    %89 = vmatpush1.msra.mxu0 %v39
    %90 = vmatprep.subr.mxu0 %v42
    %91 = vmatpush1.msra.mxu0 %v41
    %92 = vmatprep.subr.mxu0 %v44
    %93 = vmatpush1.msra.mxu0 %v43
    %94 = vmatprep.subr.mxu0 %v46
    %95 = vmatpush1.msra.mxu0 %v45
    %96 = vmatprep.subr.mxu0 %v48
    %97 = vmatpush1.msra.mxu0 %v47
    %98 = vmatprep.subr.mxu0 %v50
    %99 = vmatpush1.msra.mxu0 %v49
    %100 = vmatprep.subr.mxu0 %v52
    %101 = vmatpush1.msra.mxu0 %v51
    %102 = vmatprep.subr.mxu0 %v54
    %103 = vmatpush1.msra.mxu0 %v53
    %104 = vmatprep.subr.mxu0 %v56
    %105 = vmatpush1.msra.mxu0 %v55
    %106 = vmatprep.subr.mxu0 %v58
    %107 = vmatpush1.msra.mxu0 %v57
    %108 = vmatprep.subr.mxu0 %v60
    %109 = vmatpush1.msra.mxu0 %v59
    %110 = vmatprep.subr.mxu0 %v84
    %111 = vmatpush1.msra.mxu0 %v81
    %112 = vmatprep.subr.mxu0 0.0
    %113 = vmatpush1.msra.mxu0 0.0
    %114 = vmatprep.subr.mxu0 0.0
    %115 = vmatpush1.msra.mxu0 0.0
    %116 = vmatprep.subr.mxu0 0.0
    %117 = vmatpush1.msra.mxu0 0.0
    %118 = vmatprep.subr.mxu0 0.0
    %119 = vmatpush1.msra.mxu0 0.0
    %120 = vmatprep.subr.mxu0 0.0
    %121 = vmatpush1.msra.mxu0 0.0
    %122 = vmatprep.subr.mxu0 0.0
    %123 = vmatpush1.msra.mxu0 0.0
    %124 = vmatprep.subr.mxu0 0.0
    %125 = vmatpush1.msra.mxu0 0.0
    %126 = vmatprep.subr.mxu0 0.0
    %127 = vmatpush1.msra.mxu0 0.0
    %128 = vmatprep.subr.mxu0 0.0
    %129 = vmatpush1.msra.mxu0 0.0
    %130 = vmatprep.subr.mxu0 0.0
    %131 = vmatpush1.msra.mxu0 0.0
    %132 = vmatprep.subr.mxu0 0.0
    %133 = vmatpush1.msra.mxu0 0.0
    %134 = vmatprep.subr.mxu0 0.0
    %135 = vmatpush1.msra.mxu0 0.0
    %136 = vmatprep.subr.mxu0 0.0
    %137 = vmatpush1.msra.mxu0 0.0
    %138 = vmatprep.subr.mxu0 0.0
    %139 = vmatpush1.msra.mxu0 0.0
    %140 = vmatprep.subr.mxu0 0.0
    %141 = vmatpush1.msra.mxu0 0.0
    %142 = vmatprep.subr.mxu0 0.0
    %143 = vmatpush1.msra.mxu0 0.0
    %144 = vmatprep.subr.mxu0 0.0
    %145 = vmatpush1.msra.mxu0 0.0
    %146 = vmatprep.subr.mxu0 0.0
    %147 = vmatpush1.msra.mxu0 0.0
    %148 = vmatprep.subr.mxu0 0.0
    %149 = vmatpush1.msra.mxu0 0.0
    %150 = vmatprep.mubr.f32.mxu0 0.0
    %151 = vmatmul.mubr.f32.gmra.mrb[0].mxu0 %v77
    %v152 = vpop.f32.mrb[0].mxu0
    %v153 = vadd.f32 %v68, %v152
    %v154 = vpop.f32.mrb[0].mxu0
    %v155 = vadd.f32 %v72, %v154
    %156 = vdwg.mxu0
    %v157 = vmul.f32 %v153, 0.2
    %v158 = vmul.f32 %v155, 0.2
    %v159 = vmax.f32 %v153, %v157
    %v160 = vmax.f32 %v155, %v158
    %v161 = vld [vmem:[%s4] sm:$0xff]
    %v162 = vld [vmem:[%s4 + $0x8] sm:$0xff]
    %v163 = vld [vmem:[%s4 + $0x10] sm:$0xff]
    %v164 = vld [vmem:[%s4 + $0x18] sm:$0xff]
    %v165 = vld [vmem:[%s4 + $0x20] sm:$0xff]
    %v166 = vld [vmem:[%s4 + $0x28] sm:$0xff]
    %v167 = vld [vmem:[%s4 + $0x30] sm:$0xff]
    %v168 = vld [vmem:[%s4 + $0x38] sm:$0xff]
    %v169 = vld [vmem:[%s4 + $0x40] sm:$0xff]
    %v170 = vld [vmem:[%s4 + $0x48] sm:$0xff]
    %v171 = vld [vmem:[%s4 + $0x50] sm:$0xff]
    %v172 = vld [vmem:[%s4 + $0x58] sm:$0xff]
    %v173 = vld [vmem:[%s4 + $0x60] sm:$0xff]
    %v174 = vld [vmem:[%s4 + $0x68] sm:$0xff]
    %v175 = vld [vmem:[%s4 + $0x70] sm:$0xff]
    %v176 = vld [vmem:[%s4 + $0x78] sm:$0xff]
    %v177 = vld [vmem:[%s4 + $0x80] sm:$0xff]
    %v178 = vld [vmem:[%s4 + $0x88] sm:$0xff]
    %v179 = vld [vmem:[%s4 + $0x90] sm:$0xff]
    %v180 = vld [vmem:[%s4 + $0x98] sm:$0xff]
    %v181 = vld [vmem:[%s4 + $0xa0] sm:$0xff]
    %v182 = vld [vmem:[%s4 + $0xa8] sm:$0xff]
    %v183 = vld [vmem:[%s4 + $0xb0] sm:$0xff]
    %v184 = vld [vmem:[%s4 + $0xb8] sm:$0xff]
    %v185 = vld [vmem:[%s4 + $0xc0] sm:$0xff]
    %v186 = vld [vmem:[%s4 + $0xc8] sm:$0xff]
    %v187 = vld [vmem:[%s4 + $0xd0] sm:$0xff]
    %v188 = vld [vmem:[%s4 + $0xd8] sm:$0xff]
    %v189 = vld [vmem:[%s4 + $0xe0] sm:$0xff]
    %v190 = vld [vmem:[%s4 + $0xe8] sm:$0xff]
    %v191 = vld [vmem:[%s4 + $0xf0] sm:$0xff]
    %v192 = vld [vmem:[%s4 + $0xf8] sm:$0xff]
    %v193 = vld [vmem:[%s5] sm:$0x1]
    %v195 = vlaneseq
    %v196 = vshrl.u32 %v195, 7
    %v197 = vsub.s32 0, %v196
    %v198 = vrot.slane %v193, %v197
    %200 = vmatprep.subr.mxu0 0.0
    %201 = vmatpush1.msra.mxu0 %v161
    %202 = vmatprep.subr.mxu0 0.0
    %203 = vmatpush1.msra.mxu0 %v162
    %204 = vmatprep.subr.mxu0 0.0
    %205 = vmatpush1.msra.mxu0 %v163
    %206 = vmatprep.subr.mxu0 0.0
    %207 = vmatpush1.msra.mxu0 %v164
    %208 = vmatprep.subr.mxu0 0.0
    %209 = vmatpush1.msra.mxu0 %v165
    %210 = vmatprep.subr.mxu0 0.0
    %211 = vmatpush1.msra.mxu0 %v166
    %212 = vmatprep.subr.mxu0 0.0
    %213 = vmatpush1.msra.mxu0 %v167
    %214 = vmatprep.subr.mxu0 0.0
    %215 = vmatpush1.msra.mxu0 %v168
    %216 = vmatprep.subr.mxu0 0.0
    %217 = vmatpush1.msra.mxu0 %v169
    %218 = vmatprep.subr.mxu0 0.0
    %219 = vmatpush1.msra.mxu0 %v170
    %220 = vmatprep.subr.mxu0 0.0
    %221 = vmatpush1.msra.mxu0 %v171
    %222 = vmatprep.subr.mxu0 0.0
    %223 = vmatpush1.msra.mxu0 %v172
    %224 = vmatprep.subr.mxu0 0.0
    %225 = vmatpush1.msra.mxu0 %v173
    %226 = vmatprep.subr.mxu0 0.0
    %227 = vmatpush1.msra.mxu0 %v174
    %228 = vmatprep.subr.mxu0 0.0
    %229 = vmatpush1.msra.mxu0 %v175
    %230 = vmatprep.subr.mxu0 0.0
    %231 = vmatpush1.msra.mxu0 %v176
    %232 = vmatprep.subr.mxu0 0.0
    %233 = vmatpush1.msra.mxu0 %v177
    %234 = vmatprep.subr.mxu0 0.0
    %235 = vmatpush1.msra.mxu0 %v178
    %236 = vmatprep.subr.mxu0 0.0
    %237 = vmatpush1.msra.mxu0 %v179
    %238 = vmatprep.subr.mxu0 0.0
    %239 = vmatpush1.msra.mxu0 %v180
    %240 = vmatprep.subr.mxu0 0.0
    %241 = vmatpush1.msra.mxu0 %v181
    %242 = vmatprep.subr.mxu0 0.0
    %243 = vmatpush1.msra.mxu0 %v182
    %244 = vmatprep.subr.mxu0 0.0
    %245 = vmatpush1.msra.mxu0 %v183
    %246 = vmatprep.subr.mxu0 0.0
    %247 = vmatpush1.msra.mxu0 %v184
    %248 = vmatprep.subr.mxu0 0.0
    %249 = vmatpush1.msra.mxu0 %v185
    %250 = vmatprep.subr.mxu0 0.0
    %251 = vmatpush1.msra.mxu0 %v186
    %252 = vmatprep.subr.mxu0 0.0
    %253 = vmatpush1.msra.mxu0 %v187
    %254 = vmatprep.subr.mxu0 0.0
    %255 = vmatpush1.msra.mxu0 %v188
    %256 = vmatprep.subr.mxu0 0.0
    %257 = vmatpush1.msra.mxu0 %v189
    %258 = vmatprep.subr.mxu0 0.0
    %259 = vmatpush1.msra.mxu0 %v190
    %260 = vmatprep.subr.mxu0 0.0
    %261 = vmatpush1.msra.mxu0 %v191
    %262 = vmatprep.subr.mxu0 0.0
    %263 = vmatpush1.msra.mxu0 %v192
    %264 = vmatprep.mubr.f32.mxu0 %v160
    %265 = vmatmul.mubr.f32.gmra.mrb[0].mxu0 %v159
    %v266 = vpop.f32.mrb[0].mxu0
    %v267 = vadd.f32 %v198, %v266
    %v268 = vpop.f32.mrb[0].mxu0
    %269 = vdwg.mxu0
    %v270 = vmul.f32 %v267, 0.2
    %v271 = vmax.f32 %v267, %v270
    %v272 = vld [vmem:[%s1] sm:$0xff]
    %v273 = vld [vmem:[%s6] sm:$0xff]
    %v274 = vld [vmem:[%s6 + $0x8] sm:$0xff]
    %v275 = vld [vmem:[%s6 + $0x10] sm:$0xff]
    %v276 = vld [vmem:[%s6 + $0x18] sm:$0xff]
    %v277 = vld [vmem:[%s6 + $0x20] sm:$0xff]
    %v278 = vld [vmem:[%s6 + $0x28] sm:$0xff]
    %v279 = vld [vmem:[%s6 + $0x30] sm:$0xff]
    %v280 = vld [vmem:[%s6 + $0x38] sm:$0xff]
    %v281 = vld [vmem:[%s6 + $0x40] sm:$0xff]
    %v282 = vld [vmem:[%s6 + $0x48] sm:$0xff]
    %v283 = vld [vmem:[%s6 + $0x50] sm:$0xff]
    %v284 = vld [vmem:[%s6 + $0x58] sm:$0xff]
    %v285 = vld [vmem:[%s6 + $0x60] sm:$0xff]
    %v286 = vld [vmem:[%s6 + $0x68] sm:$0xff]
    %v287 = vld [vmem:[%s6 + $0x70] sm:$0xff]
    %v288 = vld [vmem:[%s6 + $0x78] sm:$0xff]
    %v289 = vld [vmem:[%s6 + $0x80] sm:$0xff]
    %v290 = vld [vmem:[%s6 + $0x88] sm:$0xff]
    %v291 = vld [vmem:[%s6 + $0x90] sm:$0xff]
    %v292 = vld [vmem:[%s6 + $0x98] sm:$0xff]
    %v293 = vld [vmem:[%s6 + $0xa0] sm:$0xff]
    %v294 = vld [vmem:[%s6 + $0xa8] sm:$0xff]
    %v295 = vld [vmem:[%s6 + $0xb0] sm:$0xff]
    %v296 = vld [vmem:[%s6 + $0xb8] sm:$0xff]
    %v297 = vld [vmem:[%s6 + $0xc0] sm:$0xf]
    %v298 = vld [vmem:[%s6 + $0xc8] sm:$0xf]
    %v299 = vld [vmem:[%s7] sm:$0x3]
    %v301 = vlaneseq
    %v302 = vshrl.u32 %v301, 7
    %v303 = vsub.s32 0, %v302
    %v304 = vrot.slane %v299, %v303
    %v305 = vlaneseq
    %v306 = vshrl.u32 %v305, 7
    %v307 = vsub.s32 1, %v306
    %v308 = vrot.slane %v299, %v307
    %v312 = vsel %vm75, %v272, 0
    %v315 = vsel %vm79, %v297, 0
    %v318 = vsel %vm79, %v298, 0
    %320 = vmatprep.subr.mxu0 %v274
    %321 = vmatpush1.msra.mxu0 %v273
    %322 = vmatprep.subr.mxu0 %v276
    %323 = vmatpush1.msra.mxu0 %v275
    %324 = vmatprep.subr.mxu0 %v278
    %325 = vmatpush1.msra.mxu0 %v277
    %326 = vmatprep.subr.mxu0 %v280
    %327 = vmatpush1.msra.mxu0 %v279
    %328 = vmatprep.subr.mxu0 %v282
    %329 = vmatpush1.msra.mxu0 %v281
    %330 = vmatprep.subr.mxu0 %v284
    %331 = vmatpush1.msra.mxu0 %v283
    %332 = vmatprep.subr.mxu0 %v286
    %333 = vmatpush1.msra.mxu0 %v285
    %334 = vmatprep.subr.mxu0 %v288
    %335 = vmatpush1.msra.mxu0 %v287
    %336 = vmatprep.subr.mxu0 %v290
    %337 = vmatpush1.msra.mxu0 %v289
    %338 = vmatprep.subr.mxu0 %v292
    %339 = vmatpush1.msra.mxu0 %v291
    %340 = vmatprep.subr.mxu0 %v294
    %341 = vmatpush1.msra.mxu0 %v293
    %342 = vmatprep.subr.mxu0 %v296
    %343 = vmatpush1.msra.mxu0 %v295
    %344 = vmatprep.subr.mxu0 %v318
    %345 = vmatpush1.msra.mxu0 %v315
    %346 = vmatprep.subr.mxu0 0.0
    %347 = vmatpush1.msra.mxu0 0.0
    %348 = vmatprep.subr.mxu0 0.0
    %349 = vmatpush1.msra.mxu0 0.0
    %350 = vmatprep.subr.mxu0 0.0
    %351 = vmatpush1.msra.mxu0 0.0
    %352 = vmatprep.subr.mxu0 0.0
    %353 = vmatpush1.msra.mxu0 0.0
    %354 = vmatprep.subr.mxu0 0.0
    %355 = vmatpush1.msra.mxu0 0.0
    %356 = vmatprep.subr.mxu0 0.0
    %357 = vmatpush1.msra.mxu0 0.0
    %358 = vmatprep.subr.mxu0 0.0
    %359 = vmatpush1.msra.mxu0 0.0
    %360 = vmatprep.subr.mxu0 0.0
    %361 = vmatpush1.msra.mxu0 0.0
    %362 = vmatprep.subr.mxu0 0.0
    %363 = vmatpush1.msra.mxu0 0.0
    %364 = vmatprep.subr.mxu0 0.0
    %365 = vmatpush1.msra.mxu0 0.0
    %366 = vmatprep.subr.mxu0 0.0
    %367 = vmatpush1.msra.mxu0 0.0
    %368 = vmatprep.subr.mxu0 0.0
    %369 = vmatpush1.msra.mxu0 0.0
    %370 = vmatprep.subr.mxu0 0.0
    %371 = vmatpush1.msra.mxu0 0.0
    %372 = vmatprep.subr.mxu0 0.0
    %373 = vmatpush1.msra.mxu0 0.0
    %374 = vmatprep.subr.mxu0 0.0
    %375 = vmatpush1.msra.mxu0 0.0
    %376 = vmatprep.subr.mxu0 0.0
    %377 = vmatpush1.msra.mxu0 0.0
    %378 = vmatprep.subr.mxu0 0.0
    %379 = vmatpush1.msra.mxu0 0.0
    %380 = vmatprep.subr.mxu0 0.0
    %381 = vmatpush1.msra.mxu0 0.0
    %382 = vmatprep.subr.mxu0 0.0
    %383 = vmatpush1.msra.mxu0 0.0
    %384 = vmatprep.mubr.f32.mxu0 0.0
    %385 = vmatmul.mubr.f32.gmra.mrb[0].mxu0 %v312
    %v386 = vpop.f32.mrb[0].mxu0
    %v387 = vadd.f32 %v304, %v386
    %v388 = vpop.f32.mrb[0].mxu0
    %v389 = vadd.f32 %v308, %v388
    %390 = vdwg.mxu0
    %v391 = vmul.f32 %v387, 0.2
    %v392 = vmul.f32 %v389, 0.2
    %v393 = vmax.f32 %v387, %v391
    %v394 = vmax.f32 %v389, %v392
    %v395 = vld [vmem:[%s8] sm:$0xff]
    %v396 = vld [vmem:[%s8 + $0x8] sm:$0xff]
    %v397 = vld [vmem:[%s8 + $0x10] sm:$0xff]
    %v398 = vld [vmem:[%s8 + $0x18] sm:$0xff]
    %v399 = vld [vmem:[%s8 + $0x20] sm:$0xff]
    %v400 = vld [vmem:[%s8 + $0x28] sm:$0xff]
    %v401 = vld [vmem:[%s8 + $0x30] sm:$0xff]
    %v402 = vld [vmem:[%s8 + $0x38] sm:$0xff]
    %v403 = vld [vmem:[%s8 + $0x40] sm:$0xff]
    %v404 = vld [vmem:[%s8 + $0x48] sm:$0xff]
    %v405 = vld [vmem:[%s8 + $0x50] sm:$0xff]
    %v406 = vld [vmem:[%s8 + $0x58] sm:$0xff]
    %v407 = vld [vmem:[%s8 + $0x60] sm:$0xff]
    %v408 = vld [vmem:[%s8 + $0x68] sm:$0xff]
    %v409 = vld [vmem:[%s8 + $0x70] sm:$0xff]
    %v410 = vld [vmem:[%s8 + $0x78] sm:$0xff]
    %v411 = vld [vmem:[%s8 + $0x80] sm:$0xff]
    %v412 = vld [vmem:[%s8 + $0x88] sm:$0xff]
    %v413 = vld [vmem:[%s8 + $0x90] sm:$0xff]
    %v414 = vld [vmem:[%s8 + $0x98] sm:$0xff]
    %v415 = vld [vmem:[%s8 + $0xa0] sm:$0xff]
    %v416 = vld [vmem:[%s8 + $0xa8] sm:$0xff]
    %v417 = vld [vmem:[%s8 + $0xb0] sm:$0xff]
    %v418 = vld [vmem:[%s8 + $0xb8] sm:$0xff]
    %v419 = vld [vmem:[%s8 + $0xc0] sm:$0xff]
    %v420 = vld [vmem:[%s8 + $0xc8] sm:$0xff]
    %v421 = vld [vmem:[%s8 + $0xd0] sm:$0xff]
    %v422 = vld [vmem:[%s8 + $0xd8] sm:$0xff]
    %v423 = vld [vmem:[%s8 + $0xe0] sm:$0xff]
    %v424 = vld [vmem:[%s8 + $0xe8] sm:$0xff]
    %v425 = vld [vmem:[%s8 + $0xf0] sm:$0xff]
    %v426 = vld [vmem:[%s8 + $0xf8] sm:$0xff]
    %v427 = vld [vmem:[%s9] sm:$0x1]
    %v429 = vlaneseq
    %v430 = vshrl.u32 %v429, 7
    %v431 = vsub.s32 0, %v430
    %v432 = vrot.slane %v427, %v431
    %434 = vmatprep.subr.mxu0 0.0
    %435 = vmatpush1.msra.mxu0 %v395
    %436 = vmatprep.subr.mxu0 0.0
    %437 = vmatpush1.msra.mxu0 %v396
    %438 = vmatprep.subr.mxu0 0.0
    %439 = vmatpush1.msra.mxu0 %v397
    %440 = vmatprep.subr.mxu0 0.0
    %441 = vmatpush1.msra.mxu0 %v398
    %442 = vmatprep.subr.mxu0 0.0
    %443 = vmatpush1.msra.mxu0 %v399
    %444 = vmatprep.subr.mxu0 0.0
    %445 = vmatpush1.msra.mxu0 %v400
    %446 = vmatprep.subr.mxu0 0.0
    %447 = vmatpush1.msra.mxu0 %v401
    %448 = vmatprep.subr.mxu0 0.0
    %449 = vmatpush1.msra.mxu0 %v402
    %450 = vmatprep.subr.mxu0 0.0
    %451 = vmatpush1.msra.mxu0 %v403
    %452 = vmatprep.subr.mxu0 0.0
    %453 = vmatpush1.msra.mxu0 %v404
    %454 = vmatprep.subr.mxu0 0.0
    %455 = vmatpush1.msra.mxu0 %v405
    %456 = vmatprep.subr.mxu0 0.0
    %457 = vmatpush1.msra.mxu0 %v406
    %458 = vmatprep.subr.mxu0 0.0
    %459 = vmatpush1.msra.mxu0 %v407
    %460 = vmatprep.subr.mxu0 0.0
    %461 = vmatpush1.msra.mxu0 %v408
    %462 = vmatprep.subr.mxu0 0.0
    %463 = vmatpush1.msra.mxu0 %v409
    %464 = vmatprep.subr.mxu0 0.0
    %465 = vmatpush1.msra.mxu0 %v410
    %466 = vmatprep.subr.mxu0 0.0
    %467 = vmatpush1.msra.mxu0 %v411
    %468 = vmatprep.subr.mxu0 0.0
    %469 = vmatpush1.msra.mxu0 %v412
    %470 = vmatprep.subr.mxu0 0.0
    %471 = vmatpush1.msra.mxu0 %v413
    %472 = vmatprep.subr.mxu0 0.0
    %473 = vmatpush1.msra.mxu0 %v414
    %474 = vmatprep.subr.mxu0 0.0
    %475 = vmatpush1.msra.mxu0 %v415
    %476 = vmatprep.subr.mxu0 0.0
    %477 = vmatpush1.msra.mxu0 %v416
    %478 = vmatprep.subr.mxu0 0.0
    %479 = vmatpush1.msra.mxu0 %v417
    %480 = vmatprep.subr.mxu0 0.0
    %481 = vmatpush1.msra.mxu0 %v418
    %482 = vmatprep.subr.mxu0 0.0
    %483 = vmatpush1.msra.mxu0 %v419
    %484 = vmatprep.subr.mxu0 0.0
    %485 = vmatpush1.msra.mxu0 %v420
    %486 = vmatprep.subr.mxu0 0.0
    %487 = vmatpush1.msra.mxu0 %v421
    %488 = vmatprep.subr.mxu0 0.0
    %489 = vmatpush1.msra.mxu0 %v422
    %490 = vmatprep.subr.mxu0 0.0
    %491 = vmatpush1.msra.mxu0 %v423
    %492 = vmatprep.subr.mxu0 0.0
    %493 = vmatpush1.msra.mxu0 %v424
    %494 = vmatprep.subr.mxu0 0.0
    %495 = vmatpush1.msra.mxu0 %v425
    %496 = vmatprep.subr.mxu0 0.0
    %497 = vmatpush1.msra.mxu0 %v426
    %498 = vmatprep.mubr.f32.mxu0 %v394
    %499 = vmatmul.mubr.f32.gmra.mrb[0].mxu0 %v393
    %v500 = vpop.f32.mrb[0].mxu0
    %v501 = vadd.f32 %v432, %v500
    %v502 = vpop.f32.mrb[0].mxu0
    %503 = vdwg.mxu0
    %v504 = vmul.f32 %v501, 0.2
    %v505 = vmax.f32 %v501, %v504
    %v506 = vmul.f32 %v271, %v505
    %vm507 = vcmask 408576
    %v509 = vsel %vm507, 1.0, 0
    %v512 = vsel %vm507, %v506, 0
    %514 = vmatprep.subr.mxu0 0.0
    %515 = vmatpush1.xpose.msra.mxu0 %v512
    %516 = vmatprep.subr.mxu0 0.0
    %517 = vmatpush1.xpose.msra.mxu0 0.0
    %518 = vmatprep.subr.mxu0 0.0
    %519 = vmatpush1.xpose.msra.mxu0 0.0
    %520 = vmatprep.subr.mxu0 0.0
    %521 = vmatpush1.xpose.msra.mxu0 0.0
    %522 = vmatprep.subr.mxu0 0.0
    %523 = vmatpush1.xpose.msra.mxu0 0.0
    %524 = vmatprep.subr.mxu0 0.0
    %525 = vmatpush1.xpose.msra.mxu0 0.0
    %526 = vmatprep.subr.mxu0 0.0
    %527 = vmatpush1.xpose.msra.mxu0 0.0
    %528 = vmatprep.subr.mxu0 0.0
    %529 = vmatpush1.xpose.msra.mxu0 0.0
    %530 = vmatprep.subr.mxu0 0.0
    %531 = vmatpush1.xpose.msra.mxu0 0.0
    %532 = vmatprep.subr.mxu0 0.0
    %533 = vmatpush1.xpose.msra.mxu0 0.0
    %534 = vmatprep.subr.mxu0 0.0
    %535 = vmatpush1.xpose.msra.mxu0 0.0
    %536 = vmatprep.subr.mxu0 0.0
    %537 = vmatpush1.xpose.msra.mxu0 0.0
    %538 = vmatprep.subr.mxu0 0.0
    %539 = vmatpush1.xpose.msra.mxu0 0.0
    %540 = vmatprep.subr.mxu0 0.0
    %541 = vmatpush1.xpose.msra.mxu0 0.0
    %542 = vmatprep.subr.mxu0 0.0
    %543 = vmatpush1.xpose.msra.mxu0 0.0
    %544 = vmatprep.subr.mxu0 0.0
    %545 = vmatpush1.xpose.msra.mxu0 0.0
    %546 = vmatprep.subr.mxu0 0.0
    %547 = vmatpush1.xpose.msra.mxu0 0.0
    %548 = vmatprep.subr.mxu0 0.0
    %549 = vmatpush1.xpose.msra.mxu0 0.0
    %550 = vmatprep.subr.mxu0 0.0
    %551 = vmatpush1.xpose.msra.mxu0 0.0
    %552 = vmatprep.subr.mxu0 0.0
    %553 = vmatpush1.xpose.msra.mxu0 0.0
    %554 = vmatprep.subr.mxu0 0.0
    %555 = vmatpush1.xpose.msra.mxu0 0.0
    %556 = vmatprep.subr.mxu0 0.0
    %557 = vmatpush1.xpose.msra.mxu0 0.0
    %558 = vmatprep.subr.mxu0 0.0
    %559 = vmatpush1.xpose.msra.mxu0 0.0
    %560 = vmatprep.subr.mxu0 0.0
    %561 = vmatpush1.xpose.msra.mxu0 0.0
    %562 = vmatprep.subr.mxu0 0.0
    %563 = vmatpush1.xpose.msra.mxu0 0.0
    %564 = vmatprep.subr.mxu0 0.0
    %565 = vmatpush1.xpose.msra.mxu0 0.0
    %566 = vmatprep.subr.mxu0 0.0
    %567 = vmatpush1.xpose.msra.mxu0 0.0
    %568 = vmatprep.subr.mxu0 0.0
    %569 = vmatpush1.xpose.msra.mxu0 0.0
    %570 = vmatprep.subr.mxu0 0.0
    %571 = vmatpush1.xpose.msra.mxu0 0.0
    %572 = vmatprep.subr.mxu0 0.0
    %573 = vmatpush1.xpose.msra.mxu0 0.0
    %574 = vmatprep.subr.mxu0 0.0
    %575 = vmatpush1.xpose.msra.mxu0 0.0
    %576 = vmatprep.subr.mxu0 0.0
    %577 = vmatpush1.xpose.msra.mxu0 0.0
    %578 = vmatprep.mubr.f32.mxu0 0.0
    %579 = vmatmul.mubr.f32.gmra.mrb[0].mxu0 %v509
    %v580 = vpop.f32.mrb[0].mxu0
    %v581 = vadd.f32 0.0, %v580
    %v582 = vpop.f32.mrb[0].mxu0
    %583 = vdwg.mxu0
    %vm584 = vcmask 57344
    %585 = vst.msk [vmem:[#allocation2] sm:$0x1] %vm584, %v581
    // Predicated region
    $region42: #{rank_model_forward.1} parent=1 // pred_check
      _
    $region43: #{rank_model_forward.1} parent=1 // pred_check_branch
      %587 = sbr.rel (0) target = $region45
    $region44: #{rank_model_forward.1} parent=1 // pred_region
      %s589 = ssub.s32 16, 16
      %590 = vsyncadd [#allocation3], %s589
      %s592 = sshll.u32 [#allocation2], 4
      %s593 = int_to_ptr.vmem [resolvable:$true] %s592
      %595 = dma.vmem_to_hbm [thread:$0]  %s593, 16, %s10, [#allocation3]
    $region45: #{rank_model_forward.1} parent=1 // pred_fallthru
      _
    // Predicated region
    $region46: #{rank_model_forward.1} parent=1 // pred_check
      _
    $region47: #{rank_model_forward.1} parent=1 // pred_check_branch
      %597 = sbr.rel (0) target = $region49
    $region48: #{rank_model_forward.1} parent=1 // pred_region
      %598 = dma.done [#allocation3], 16
    $region49: #{rank_model_forward.1} parent=1 // pred_fallthru
      _
    %599 = vsyncpa [#allocation3], 1

</llo_original>
